<compile_context>
chip_gen: v5e
topology: v5e:2x2
jax: 0.10.0
libtpu: 0.0.40
codegen_flags: <defaults>
</compile_context>

<pallas_src>
import functools

import jax
import jax.numpy as jnp
from jax import lax
from jax.experimental import pallas as pl
from jax.experimental.pallas import tpu as pltpu


def _round_up(x, m):
    return (x + m - 1) // m * m


def _vmem_budgets():
    """Generation-aware (physical_vmem, base_vmem_limit, per-buffer budget)."""
    cap = 64 * 1024 * 1024
    try:
        info = pltpu.get_tpu_info()
        cap = int(getattr(info, "vmem_capacity_bytes", cap))
    except Exception:
        pass
    if cap >= 128 * 1024 * 1024:                     # v5e / v6e: 128 MiB VMEM
        return cap, 96 * 1024 * 1024, 8 * 1024 * 1024
    return cap, 32 * 1024 * 1024, 4 * 1024 * 1024    # v7x: 64 MiB per TC


def _vmem_limit(need_bytes, base_limit, cap):
    """Raise the scoped VMEM limit to cover the estimated need, capped below phys."""
    limit = max(base_limit, int(need_bytes) + (4 << 20))
    return int(min(limit, cap - (2 << 20)))


def _resident_spec(shape, index_map):
    """Constant-index-map operand: single-buffered (fetched once, no double buffer)."""
    if hasattr(pl, "Buffered"):
        try:
            return pl.BlockSpec(shape, index_map, pipeline_mode=pl.Buffered(1))
        except TypeError:
            pass
    return pl.BlockSpec(shape, index_map)


def _pick_tm(n, c, budget):
    """Row tile for kernel 1: 256-aligned (MXU), up to 1024, within budget."""
    tm_cap = max(256, (budget // max(1, 4 * c)) // 256 * 256)
    tm = min(1024, tm_cap)
    if n <= tm:
        return n                 # single block covering the full (maybe ragged) N
    return tm                    # multiple of 256; ragged last block handled by Pallas


def _pick_bc_tiles(t, b, c, budget):
    """(TB, TC) for kernel 2: lane-dense TC first, then largest TB, within budget."""
    tbs = [tb for tb in (32, 16, 8) if b % tb == 0] or [b]
    tcs = [tc for tc in (1024, 512, 256, 128) if c % tc == 0] or [c]
    for tc in tcs:
        for tb in tbs:
            if t * tb * tc * 4 <= budget:            # f32 output block dominates
                return tb, tc
    # Nothing fits the budget: take the minimum legal tile; the per-call vmem
    # limit is raised to the real need.  TODO(synk): halo time tiling here.
    return tbs[-1], tcs[-1]


def _pick_tt(t, h, t_pad, budget, itemsize):
    cap = budget // max(1, h * t_pad * itemsize)
    cap = max(8, (cap // 8) * 8)
    return t if t <= cap else int(cap)


# ----------------------------------------------------------------------------
# Kernel 1: input projection (+ GLU), row-tiled over N = T*B, bf16 output
# ----------------------------------------------------------------------------
def _proj_glu_kernel(x_ref, wa_ref, wg_ref, ba_ref, bg_ref, o_ref):
    # x_ref: (TM, C)  wa/wg: (C, C)  ba/bg: (1, C)  o_ref: (TM, C) bf16
    x = x_ref[...]
    a = jnp.dot(x, wa_ref[...], preferred_element_type=jnp.float32) + ba_ref[...]
    g = jnp.dot(x, wg_ref[...], preferred_element_type=jnp.float32) + bg_ref[...]
    o_ref[...] = (a * jax.nn.sigmoid(g)).astype(o_ref.dtype)


def _proj_kernel(x_ref, w_ref, b_ref, o_ref):
    x = x_ref[...]
    o_ref[...] = (jnp.dot(x, w_ref[...], preferred_element_type=jnp.float32)
                  + b_ref[...]).astype(o_ref.dtype)


# ----------------------------------------------------------------------------
# Kernel 2: lightweight depthwise conv, tiled over (batch, channel) blocks.
# No in-kernel pad / no separate acc: per-tap static slice accumulate into the
# f32 output block.  bf16 input, f32 accumulation.
# ----------------------------------------------------------------------------
def _lightconv_kernel(h_ref, wc_ref, o_ref, *, padding_l):
    # h_ref: (T, TB, TC) bf16   wc_ref: (K, TC) f32   o_ref: (T, TB, TC) f32
    T = o_ref.shape[0]
    K = wc_ref.shape[0]
    P = padding_l
    wc = wc_ref[...]
    # Center tap (time offset 0) covers every output row -> initializes o_ref.
    o_ref[...] = wc[P:P + 1, :][None] * h_ref[...].astype(jnp.float32)
    for k in range(K):                       # K is a small static constant
        if k == P:
            continue
        d = k - P                            # source time offset
        L = T - abs(d)
        if L <= 0:
            continue
        a = max(0, -d)                       # output row start
        b = max(0, d)                        # input row start
        o_ref[a:a + L] = (o_ref[a:a + L]
                          + wc[k:k + 1, :][None] * h_ref[b:b + L].astype(jnp.float32))


# ----------------------------------------------------------------------------
# Kernel 3: banded weight_expanded (input-independent), batch broadcast via out
# BlockSpec, bf16 lane-dense output (last dim padded to a multiple of 128).
# NOTE: the batch grid axis MUST stay "arbitrary" (sequential) — the scratch is
# only recomputed at bi == 0.
# ----------------------------------------------------------------------------
def _band_kernel(w_ref, attn_ref, band_scratch, *, padding_l):
    # w_ref: (H, K) softmaxed taps (f32)
    # attn_ref: (1, H, TT, TPAD) output tile for batch slot `bi`
    # band_scratch: (H, TT, TPAD) persists across grid steps (recomputed at bi==0)
    ti = pl.program_id(0)
    bi = pl.program_id(1)
    H, TT, TP = band_scratch.shape
    K = w_ref.shape[1]
    P = padding_l

    @pl.when(bi == 0)
    def _():
        w = w_ref[...]                                               # (H, K)
        t_idx = lax.broadcasted_iota(jnp.int32, (TT, TP), 0) + ti * TT
        s_idx = lax.broadcasted_iota(jnp.int32, (TT, TP), 1)
        rel = s_idx - t_idx + P                                      # tap index feeding (t, s)
        band = jnp.zeros((H, TT, TP), jnp.float32)
        for k in range(K):
            w_k = w[:, k:k + 1]                                      # (H, 1)
            band = band + w_k[:, :, None] * (rel == k).astype(jnp.float32)[None]
        band_scratch[...] = band.astype(band_scratch.dtype)

    attn_ref[0] = band_scratch[...]


# ----------------------------------------------------------------------------
# Wrapper (glue: reshapes, specs, tiny XLA-side prep)
# ----------------------------------------------------------------------------
def lightweight_conv_forward(hidden_states, attention_mask, params, *,
                             num_heads, kernel_size, use_glu=True,
                             output_attentions=True, head_mask=None,
                             attn_dtype=jnp.bfloat16):
    del attention_mask, head_mask  # unused in the reference forward as well
    T, B, C = hidden_states.shape
    H, K = num_heads, kernel_size
    assert C % H == 0 and K % 2 == 1, "odd kernel_size / divisible heads only"
    R = C // H
    P = K // 2
    N = T * B
    out_dim = 2 * C if use_glu else C

    cap, base_limit, buf_budget = _vmem_budgets()

    Wp = params["proj_w"].astype(jnp.float32)   # (C, out_dim)
    bp = params["proj_b"].astype(jnp.float32)   # (out_dim,)
    wconv = params["conv_w"].reshape(H, K).astype(jnp.float32)

    # --- hoisted XLA prep: tap softmax + per-channel (K, C) tap table ---
    w_soft = jax.nn.softmax(wconv, axis=-1)                 # (H, K)
    wc_kc = jnp.repeat(w_soft, R, axis=0).transpose(1, 0)   # (K, C)

    # --- kernel 1: input projection + GLU, row-tiled, bf16 output ---
    x2d = hidden_states.reshape(N, C).astype(jnp.float32)
    TM = _pick_tm(N, C, buf_budget)
    grid1 = (pl.cdiv(N, TM),)
    h_dtype = jnp.bfloat16
    w_bytes = (2 * C * C * 4) if use_glu else (C * out_dim * 4)
    need1 = 2 * TM * C * 4 + 2 * TM * C * 2 + w_bytes + 8 * out_dim
    cost1 = pl.CostEstimate(flops=2 * N * C * out_dim,
                            transcendentals=(N * C if use_glu else 0),
                            bytes_accessed=4 * (N * C + C * out_dim + out_dim) + 2 * N * C)
    cp1 = pltpu.CompilerParams(dimension_semantics=("parallel",),
                               vmem_limit_bytes=_vmem_limit(need1, base_limit, cap))
    if use_glu:
        Wa, Wg = Wp[:, :C], Wp[:, C:]
        ba, bg = bp[:C].reshape(1, C), bp[C:].reshape(1, C)
        h2d = pl.pallas_call(
            _proj_glu_kernel,
            out_shape=jax.ShapeDtypeStruct((N, C), h_dtype),
            grid=grid1,
            in_specs=[pl.BlockSpec((TM, C), lambda i: (i, 0)),
                      _resident_spec((C, C), lambda i: (0, 0)),
                      _resident_spec((C, C), lambda i: (0, 0)),
                      _resident_spec((1, C), lambda i: (0, 0)),
                      _resident_spec((1, C), lambda i: (0, 0))],
            out_specs=pl.BlockSpec((TM, C), lambda i: (i, 0)),
            compiler_params=cp1,
            cost_estimate=cost1,
        )(x2d, Wa, Wg, ba, bg)
    else:
        h2d = pl.pallas_call(
            _proj_kernel,
            out_shape=jax.ShapeDtypeStruct((N, C), h_dtype),
            grid=grid1,
            in_specs=[pl.BlockSpec((TM, C), lambda i: (i, 0)),
                      _resident_spec((C, out_dim), lambda i: (0, 0)),
                      _resident_spec((1, out_dim), lambda i: (0, 0))],
            out_specs=pl.BlockSpec((TM, C), lambda i: (i, 0)),
            compiler_params=cp1,
            cost_estimate=cost1,
        )(x2d, Wp, bp.reshape(1, out_dim))

    h = h2d.reshape(T, B, C)   # free reshape (contiguous), bf16

    # --- kernel 2: lightweight conv, tiled over (batch, channel) blocks ---
    TB, TC = _pick_bc_tiles(T, B, C, buf_budget)
    grid2 = (pl.cdiv(B, TB), pl.cdiv(C, TC))
    need2 = 2 * T * TB * TC * 2 + 2 * T * TB * TC * 4 + 2 * K * TC * 4
    cost2 = pl.CostEstimate(flops=2 * T * B * C * K, transcendentals=0,
                            bytes_accessed=2 * T * B * C + 4 * T * B * C + 4 * K * C)
    out = pl.pallas_call(
        functools.partial(_lightconv_kernel, padding_l=P),
        out_shape=jax.ShapeDtypeStruct((T, B, C), jnp.float32),
        grid=grid2,
        in_specs=[pl.BlockSpec((T, TB, TC), lambda bi, ci: (0, bi, ci)),
                  pl.BlockSpec((K, TC), lambda bi, ci: (0, ci))],
        out_specs=pl.BlockSpec((T, TB, TC), lambda bi, ci: (0, bi, ci)),
        compiler_params=pltpu.CompilerParams(
            dimension_semantics=("parallel", "parallel"),
            vmem_limit_bytes=_vmem_limit(need2, base_limit, cap)),
        cost_estimate=cost2,
    )(h, wc_kc)

    if not output_attentions:
        return (out,)

    # --- kernel 3: banded weight_expanded, batch broadcast via out BlockSpec ---
    attn_itemsize = jnp.dtype(attn_dtype).itemsize
    TPAD = _round_up(T, 128)            # lane-dense stores (unmasked vst)
    TT = _pick_tt(T, H, TPAD, buf_budget, attn_itemsize)
    NT = pl.cdiv(T, TT)
    need3 = 3 * H * TT * TPAD * attn_itemsize + 8 * H * K
    cost3 = pl.CostEstimate(flops=2 * K * H * T * T, transcendentals=0,
                            bytes_accessed=B * H * T * TPAD * attn_itemsize + 4 * H * K)
    attn = pl.pallas_call(
        functools.partial(_band_kernel, padding_l=P),
        out_shape=jax.ShapeDtypeStruct((B, H, T, TPAD), attn_dtype),
        grid=(NT, B),
        in_specs=[pl.BlockSpec((H, K), lambda ti, bi: (0, 0))],
        out_specs=pl.BlockSpec((1, H, TT, TPAD), lambda ti, bi: (bi, 0, ti, 0)),
        scratch_shapes=[pltpu.VMEM((H, TT, TPAD), attn_dtype)],
        compiler_params=pltpu.CompilerParams(
            # batch axis must remain "arbitrary": band scratch is reused across it
            dimension_semantics=("parallel", "arbitrary"),
            vmem_limit_bytes=_vmem_limit(need3, base_limit, cap)),
        cost_estimate=cost3,
    )(w_soft)
    if TPAD != T:
        attn = attn[..., :T]            # XLA slice back to the logical width
    attn = attn.reshape(B * H, T, T)    # (b*H + h, t, s) layout matches reference

    return out, attn


# ----------------------------------------------------------------------------
# Deterministic parameter init (mirrors the module shapes; synthetic values)
# ----------------------------------------------------------------------------
def init_params(key, hidden_size, num_heads, kernel_size, use_glu):
    C, H, K = hidden_size, num_heads, kernel_size
    out_dim = 2 * C if use_glu else C
    k1, k2, k3 = jax.random.split(key, 3)
    lim = 1.0 / jnp.sqrt(C)
    proj_w = jax.random.uniform(k1, (C, out_dim), jnp.float32, -lim, lim)
    proj_b = jax.random.uniform(k2, (out_dim,), jnp.float32, -lim, lim)
    bound = jnp.sqrt(6.0 / (K + H * K))
    conv_w = jax.random.uniform(k3, (H, 1, K), jnp.float32, -bound, bound)
    return {"proj_w": proj_w, "proj_b": proj_b, "conv_w": conv_w}


# ----------------------------------------------------------------------------
# Pure-JAX f32 reference (mirrors the PyTorch bmm formulation) for verification
# ----------------------------------------------------------------------------
def _reference(hidden_states, params, num_heads, kernel_size, use_glu):
    T, B, C = hidden_states.shape
    H, K = num_heads, kernel_size
    R = C // H
    P = K // 2
    proj = hidden_states.reshape(T * B, C) @ params["proj_w"] + params["proj_b"]
    if use_glu:
        proj = proj[:, :C] * jax.nn.sigmoid(proj[:, C:])
    h = proj.reshape(T, B, C)
    w = jax.nn.softmax(params["conv_w"].reshape(H, K), axis=-1)
    t = jnp.arange(T)[:, None]
    s = jnp.arange(T)[None, :]
    rel = s - t + P
    valid = (rel >= 0) & (rel < K)
    band = jnp.where(valid[None], w[:, jnp.clip(rel, 0, K - 1)], 0.0)     # (H, T, T)
    we = jnp.broadcast_to(band[None], (B, H, T, T)).reshape(B * H, T, T)  # weight_expanded
    xh = h.reshape(T, B * H, R).transpose(1, 0, 2)                        # (B*H, T, R)
    out = jnp.einsum("bts,bsr->btr", we, xh)
    out = out.transpose(1, 0, 2).reshape(T, B, C)
    return out, we


if __name__ == "__main__":
    # config: hidden_size=32, num_attention_heads=4, kernel_size=3, use_glu=True,
    #         attention_probs_dropout_prob=0.0, output_attentions=True
    T, B = 8, 2
    hidden_size = 32
    num_heads = 4
    kernel_size = 3
    use_glu = True

    key = jax.random.PRNGKey(0)
    params = init_params(key, hidden_size, num_heads, kernel_size, use_glu)
    x = jax.random.normal(jax.random.fold_in(key, 99), (T, B, hidden_size), jnp.float32)
    attention_mask = jnp.zeros((B, 1, 1, T), jnp.float32)  # unused (parity with module API)

    context, attn_probs = lightweight_conv_forward(
        x, attention_mask, params,
        num_heads=num_heads, kernel_size=kernel_size, use_glu=use_glu,
        output_attentions=True)
    context, attn_probs = jax.block_until_ready((context, attn_probs))

    ref_out, ref_attn = _reference(x, params, num_heads, kernel_size, use_glu)
    assert context.shape == (T, B, hidden_size)
    assert attn_probs.shape == (B * num_heads, T, T)
    # h intermediate and attention_probs are stored in bf16 -> loosened tolerances
    # (accumulation is f32; errors are pure bf16 quantization, << these bounds).
    assert jnp.allclose(context, ref_out, atol=2e-2, rtol=2e-2)
    assert jnp.allclose(attn_probs.astype(jnp.float32), ref_attn, atol=5e-3, rtol=0)
    print("KERNEL_OK")
</pallas_src>

<mosaic_0001>
module attributes {stable_mosaic.version = 11 : i64} {
  func.func @_proj_glu_kernel(%arg0: i32, %arg1: memref<16x32xf32, #tpu.memory_space<vmem>>, %arg2: memref<32x32xf32, #tpu.memory_space<vmem>>, %arg3: memref<32x32xf32, #tpu.memory_space<vmem>>, %arg4: memref<1x32xf32, #tpu.memory_space<vmem>>, %arg5: memref<1x32xf32, #tpu.memory_space<vmem>>, %arg6: memref<16x32xbf16, #tpu.memory_space<vmem>>) attributes {dimension_semantics = [#tpu.dimension_semantics<parallel>], iteration_bounds = array<i64: 1>, scalar_prefetch = 0 : i64, scratch_operands = 0 : i64, tpu.core_type = #tpu.core_type<tc>, window_params = [{transform_indices = @transform_0, window_bounds = array<i64: 16, 32>}, {pipeline_mode = #tpu.pipeline_mode<synchronous>, transform_indices = @transform_1, window_bounds = array<i64: 32, 32>}, {pipeline_mode = #tpu.pipeline_mode<synchronous>, transform_indices = @transform_2, window_bounds = array<i64: 32, 32>}, {pipeline_mode = #tpu.pipeline_mode<synchronous>, transform_indices = @transform_3, window_bounds = array<i64: 1, 32>}, {pipeline_mode = #tpu.pipeline_mode<synchronous>, transform_indices = @transform_4, window_bounds = array<i64: 1, 32>}, {transform_indices = @transform_5, window_bounds = array<i64: 16, 32>}]} {
    %c0 = arith.constant 0 : index
    %c0_0 = arith.constant 0 : index
    %0 = vector.load %arg1[%c0, %c0_0] : memref<16x32xf32, #tpu.memory_space<vmem>>, vector<16x32xf32>
    %c0_1 = arith.constant 0 : index
    %c0_2 = arith.constant 0 : index
    %1 = vector.load %arg2[%c0_1, %c0_2] : memref<32x32xf32, #tpu.memory_space<vmem>>, vector<32x32xf32>
    %cst = arith.constant dense<0.000000e+00> : vector<16x32xf32>
    %2 = tpu.matmul %0, %1, %cst {dimension_numbers = #tpu.dot_dimension_numbers<[1], [0], [0], [1], [0, 0, 1, 1], [], []>} : vector<16x32xf32>, vector<32x32xf32>, vector<16x32xf32> -> vector<16x32xf32>
    %c0_3 = arith.constant 0 : index
    %c0_4 = arith.constant 0 : index
    %3 = vector.load %arg4[%c0_3, %c0_4] : memref<1x32xf32, #tpu.memory_space<vmem>>, vector<1x32xf32>
    %4 = vector.broadcast %3 : vector<1x32xf32> to vector<16x32xf32>
    %5 = arith.addf %2, %4 : vector<16x32xf32>
    %c0_5 = arith.constant 0 : index
    %c0_6 = arith.constant 0 : index
    %6 = vector.load %arg3[%c0_5, %c0_6] : memref<32x32xf32, #tpu.memory_space<vmem>>, vector<32x32xf32>
    %cst_7 = arith.constant dense<0.000000e+00> : vector<16x32xf32>
    %7 = tpu.matmul %0, %6, %cst_7 {dimension_numbers = #tpu.dot_dimension_numbers<[1], [0], [0], [1], [0, 0, 1, 1], [], []>} : vector<16x32xf32>, vector<32x32xf32>, vector<16x32xf32> -> vector<16x32xf32>
    %c0_8 = arith.constant 0 : index
    %c0_9 = arith.constant 0 : index
    %8 = vector.load %arg5[%c0_8, %c0_9] : memref<1x32xf32, #tpu.memory_space<vmem>>, vector<1x32xf32>
    %9 = vector.broadcast %8 : vector<1x32xf32> to vector<16x32xf32>
    %10 = arith.addf %7, %9 : vector<16x32xf32>
    %11 = arith.negf %10 : vector<16x32xf32>
    %12 = math.exp %11 : vector<16x32xf32>
    %cst_10 = arith.constant 1.000000e+00 : f32
    %13 = vector.broadcast %cst_10 : f32 to vector<16x32xf32>
    %14 = arith.addf %13, %12 : vector<16x32xf32>
    %15 = arith.divf %13, %14 : vector<16x32xf32>
    %16 = arith.mulf %5, %15 : vector<16x32xf32>
    %17 = arith.truncf %16 : vector<16x32xf32> to vector<16x32xbf16>
    %c0_11 = arith.constant 0 : index
    %c0_12 = arith.constant 0 : index
    %18 = vector.load %arg6[%c0_11, %c0_12] : memref<16x32xbf16, #tpu.memory_space<vmem>>, vector<16x32xbf16>
    tpu.vector_store %arg6[%c0_11, %c0_12], %17 {strides = array<i32>} : memref<16x32xbf16, #tpu.memory_space<vmem>>, vector<16x32xbf16>,
    return
  }
  func.func @transform_0(%arg0: i32) -> (i32, i32) {
    %c0_i32 = arith.constant 0 : i32
    %c0_i32_0 = arith.constant 0 : i32
    return %arg0, %c0_i32 : i32, i32
  }
  func.func @transform_1(%arg0: i32) -> (i32, i32) {
    %c0_i32 = arith.constant 0 : i32
    %c0_i32_0 = arith.constant 0 : i32
    %c0_i32_1 = arith.constant 0 : i32
    return %c0_i32, %c0_i32_0 : i32, i32
  }
  func.func @transform_2(%arg0: i32) -> (i32, i32) {
    %c0_i32 = arith.constant 0 : i32
    %c0_i32_0 = arith.constant 0 : i32
    %c0_i32_1 = arith.constant 0 : i32
    return %c0_i32, %c0_i32_0 : i32, i32
  }
  func.func @transform_3(%arg0: i32) -> (i32, i32) {
    %c0_i32 = arith.constant 0 : i32
    %c0_i32_0 = arith.constant 0 : i32
    %c0_i32_1 = arith.constant 0 : i32
    return %c0_i32, %c0_i32_0 : i32, i32
  }
  func.func @transform_4(%arg0: i32) -> (i32, i32) {
    %c0_i32 = arith.constant 0 : i32
    %c0_i32_0 = arith.constant 0 : i32
    %c0_i32_1 = arith.constant 0 : i32
    return %c0_i32, %c0_i32_0 : i32, i32
  }
  func.func @transform_5(%arg0: i32) -> (i32, i32) {
    %c0_i32 = arith.constant 0 : i32
    %c0_i32_0 = arith.constant 0 : i32
    return %arg0, %c0_i32 : i32, i32
  }
}

</mosaic_0001>

<llo_original>
// kernel: tpu_custom_call.1
$region0: #{tpu_custom_call.1}
  #allocation0 [shape = 'u32[]', space=smem, size = 0x4, offset = 0x4, fixed_abs, tag = 'smem constant byte address 0x4 - core index']
  #allocation1 [shape = 'u32[72,128]{1,0:T(1,128)}', space=vmem, size = 0x9000, scoped, tag = 'internal scratch']
  %s0 = inlined_call_operand.hbm [shape: f32[16,32], index: 0, kind: input, shape index: {}]
  %s1 = inlined_call_operand.hbm [shape: f32[32,32], index: 1, kind: input, shape index: {}]
  %s2 = inlined_call_operand.hbm [shape: f32[32,32], index: 2, kind: input, shape index: {}]
  %s3 = inlined_call_operand.vmem [shape: f32[1,32], index: 3, kind: input, shape index: {}]
  %s4 = inlined_call_operand.vmem [shape: f32[1,32], index: 4, kind: input, shape index: {}]
  %s5 = inlined_call_operand.hbm [shape: bf16[16,32], index: 5, kind: output, shape index: {}]
  %s6 = sld [smem:[#allocation0]]
  $region42: #{tpu_custom_call.1} parent=0
    _
  %s8 = ssub.s32 1, %s6
  %s9 = scalar_select 0, %s8, %s6
  $region1: #{tpu_custom_call.1} parent=0
    #allocation2 [shape = 'u8[8192]{0}', space=vmem, size = 0x2000, scoped, tag = 'input window, operand 0, single buffered']
    #allocation3 [shape = 's32[1]{0}', space=sflag, size = 0x4, scoped, tag = 'scoped memory for tpu_custom_call.1']
    #allocation4 [shape = 's32[1]{0}', space=sflag, size = 0x4, scoped, tag = 'scoped memory for tpu_custom_call.1']
    #allocation5 [shape = 'u8[16384]{0}', space=vmem, size = 0x4000, scoped, tag = 'input window, operand 1, single buffered']
    #allocation6 [shape = 's32[1]{0}', space=sflag, size = 0x4, scoped, tag = 'scoped memory for tpu_custom_call.1']
    #allocation7 [shape = 'u8[16384]{0}', space=vmem, size = 0x4000, scoped, tag = 'input window, operand 2, single buffered']
    #allocation8 [shape = 'u8[4096]{0}', space=vmem, size = 0x1000, scoped, tag = 'output window, operand 0, single buffered']
    %10 = vsyncpa [#allocation3], 0
    %11 = vsyncpa [#allocation6], 0
    %12 = vsyncpa [#allocation4], 0
    // Predicated region
    $region2: #{tpu_custom_call.1} parent=1 // pred_check
      _
    $region3: #{tpu_custom_call.1} parent=1 // pred_check_branch
      %14 = sbr.rel (0) target = $region5
    $region4: #{tpu_custom_call.1} parent=1 // pred_region
      %16 = vsyncadd [#allocation3], 0
      %s17 = sshll.u32 %s0, 4
      %s18 = int_to_ptr.hbm [resolvable:$true] %s17
      %s19 = sshll.u32 [#allocation2], 4
      %s20 = int_to_ptr.vmem [resolvable:$true] %s19
      %25 = dma.hbm_to_vmem [thread:$0]  %s18, 256, %s20, [#allocation3], 128, 128, 8
    $region5: #{tpu_custom_call.1} parent=1 // pred_fallthru
      _
    // Predicated region
    $region6: #{tpu_custom_call.1} parent=1 // pred_check
      _
    $region7: #{tpu_custom_call.1} parent=1 // pred_check_branch
      %27 = sbr.rel (0) target = $region9
    $region8: #{tpu_custom_call.1} parent=1 // pred_region
      %29 = vsyncadd [#allocation6], 0
      %s30 = sshll.u32 %s1, 4
      %s31 = int_to_ptr.hbm [resolvable:$true] %s30
      %s32 = sshll.u32 [#allocation5], 4
      %s33 = int_to_ptr.vmem [resolvable:$true] %s32
      %38 = dma.hbm_to_vmem [thread:$0]  %s31, 512, %s33, [#allocation6], 128, 128, 8
    $region9: #{tpu_custom_call.1} parent=1 // pred_fallthru
      _
    // Predicated region
    $region10: #{tpu_custom_call.1} parent=1 // pred_check
      _
    $region11: #{tpu_custom_call.1} parent=1 // pred_check_branch
      %40 = sbr.rel (0) target = $region13
    $region12: #{tpu_custom_call.1} parent=1 // pred_region
      %42 = vsyncadd [#allocation6], 0
      %s43 = sshll.u32 %s2, 4
      %s44 = int_to_ptr.hbm [resolvable:$true] %s43
      %s45 = sshll.u32 [#allocation7], 4
      %s46 = int_to_ptr.vmem [resolvable:$true] %s45
      %51 = dma.hbm_to_vmem [thread:$0]  %s44, 512, %s46, [#allocation6], 128, 128, 8
    $region13: #{tpu_custom_call.1} parent=1 // pred_fallthru
      _
    // Predicated region
    $region14: #{tpu_custom_call.1} parent=1 // pred_check
      _
    $region15: #{tpu_custom_call.1} parent=1 // pred_check_branch
      %53 = sbr.rel (0) target = $region17
    $region16: #{tpu_custom_call.1} parent=1 // pred_region
      _
    $region17: #{tpu_custom_call.1} parent=1 // pred_fallthru
      _
    // Predicated region
    $region18: #{tpu_custom_call.1} parent=1 // pred_check
      _
    $region19: #{tpu_custom_call.1} parent=1 // pred_check_branch
      %55 = sbr.rel (0) target = $region21
    $region20: #{tpu_custom_call.1} parent=1 // pred_region
      _
    $region21: #{tpu_custom_call.1} parent=1 // pred_fallthru
      _
    // Predicated region
    $region22: #{tpu_custom_call.1} parent=1 // pred_check
      _
    $region23: #{tpu_custom_call.1} parent=1 // pred_check_branch
      %57 = sbr.rel (0) target = $region25
    $region24: #{tpu_custom_call.1} parent=1 // pred_region
      %59 = dma.done [#allocation3], 256
    $region25: #{tpu_custom_call.1} parent=1 // pred_fallthru
      _
    // Predicated region
    $region26: #{tpu_custom_call.1} parent=1 // pred_check
      _
    $region27: #{tpu_custom_call.1} parent=1 // pred_check_branch
      %61 = sbr.rel (0) target = $region29
    $region28: #{tpu_custom_call.1} parent=1 // pred_region
      %63 = dma.done [#allocation6], 512
    $region29: #{tpu_custom_call.1} parent=1 // pred_fallthru
      _
    // Predicated region
    $region30: #{tpu_custom_call.1} parent=1 // pred_check
      _
    $region31: #{tpu_custom_call.1} parent=1 // pred_check_branch
      %65 = sbr.rel (0) target = $region33
    $region32: #{tpu_custom_call.1} parent=1 // pred_region
      %67 = dma.done [#allocation6], 512
    $region33: #{tpu_custom_call.1} parent=1 // pred_fallthru
      _
    %v68 = vld [vmem:[#allocation2] sm:$0xff]
    %v69 = vld [vmem:[#allocation2 + $0x8] sm:$0xff]
    %v70 = vld [vmem:[#allocation5] sm:$0xff]
    %v71 = vld [vmem:[#allocation5 + $0x8] sm:$0xff]
    %v72 = vld [vmem:[#allocation5 + $0x10] sm:$0xff]
    %v73 = vld [vmem:[#allocation5 + $0x18] sm:$0xff]
    %v74 = vld [vmem:[%s3] sm:$0x1]
    %v76 = vperm.slane %v74, 0
    %vm78 = vcmask 261120
    %v80 = vsel %vm78, %v68, 0
    %v83 = vsel %vm78, %v69, 0
    %85 = vmatpush.msra.mxu0 0.0
    %86 = vmatpush.msra.mxu0 0.0
    %87 = vmatpush.msra.mxu0 0.0
    %88 = vmatpush.msra.mxu0 0.0
    %89 = vmatpush.msra.mxu0 0.0
    %90 = vmatpush.msra.mxu0 0.0
    %91 = vmatpush.msra.mxu0 0.0
    %92 = vmatpush.msra.mxu0 0.0
    %93 = vmatpush.msra.mxu0 0.0
    %94 = vmatpush.msra.mxu0 0.0
    %95 = vmatpush.msra.mxu0 0.0
    %96 = vmatpush.msra.mxu0 0.0
    %97 = vmatpush.msra.mxu0 %v73
    %98 = vmatpush.msra.mxu0 %v72
    %99 = vmatpush.msra.mxu0 %v71
    %100 = vmatpush.msra.mxu0 %v70
    %101 = vmatmul.f32.gmra.mxu0 %v80
    %v102 = vpop.f32.mrf.mxu0
    %v103 = vadd.f32 %v76, %v102
    %104 = vmatmul.f32.gmra.mxu0 %v83
    %v105 = vpop.f32.mrf.mxu0
    %v106 = vadd.f32 %v76, %v105
    %107 = vdwg.mxu0
    %v108 = vld [vmem:[#allocation7] sm:$0xff]
    %v109 = vld [vmem:[#allocation7 + $0x8] sm:$0xff]
    %v110 = vld [vmem:[#allocation7 + $0x10] sm:$0xff]
    %v111 = vld [vmem:[#allocation7 + $0x18] sm:$0xff]
    %v112 = vld [vmem:[%s4] sm:$0x1]
    %v114 = vperm.slane %v112, 0
    %116 = vmatpush.msra.mxu0 0.0
    %117 = vmatpush.msra.mxu0 0.0
    %118 = vmatpush.msra.mxu0 0.0
    %119 = vmatpush.msra.mxu0 0.0
    %120 = vmatpush.msra.mxu0 0.0
    %121 = vmatpush.msra.mxu0 0.0
    %122 = vmatpush.msra.mxu0 0.0
    %123 = vmatpush.msra.mxu0 0.0
    %124 = vmatpush.msra.mxu0 0.0
    %125 = vmatpush.msra.mxu0 0.0
    %126 = vmatpush.msra.mxu0 0.0
    %127 = vmatpush.msra.mxu0 0.0
    %128 = vmatpush.msra.mxu0 %v111
    %129 = vmatpush.msra.mxu0 %v110
    %130 = vmatpush.msra.mxu0 %v109
    %131 = vmatpush.msra.mxu0 %v108
    %132 = vmatmul.f32.gmra.mxu0 %v80
    %v133 = vpop.f32.mrf.mxu0
    %v134 = vadd.f32 %v114, %v133
    %135 = vmatmul.f32.gmra.mxu0 %v83
    %v136 = vpop.f32.mrf.mxu0
    %v137 = vadd.f32 %v114, %v136
    %138 = vdwg.mxu0
    %v139 = vxor.u32 %v134, 2147483648
    %v140 = vxor.u32 %v137, 2147483648
    %v141 = vmul.f32 %v139, 1.442695
    %v142 = vpow.pop %v141
    %v143 = vmul.f32 %v140, 1.442695
    %v144 = vpow.pop %v143
    %v145 = vadd.f32 %v142, 1.0
    %v146 = vadd.f32 %v144, 1.0
    %v147 = vrcp.pop %v145
    %v148 = vmul.f32 %v145, %v147
    %v149 = vsub.f32 1.0, %v148
    %v150 = vmul.f32 %v147, %v149
    %v151 = vadd.f32 %v147, %v150
    %vm152 = vweird.f32 %v145
    %vm153 = vweird.f32 %v147
    %vm154 = vmor %vm152, %vm153
    %v155 = vsel %vm154, %v147, %v151
    %v156 = vand.u32 2147483647, %v145
    %vm157 = vcmp.eq.f32.partialorder %v156, 8.507059e+37
    %v158 = vand.u32 %v145, 2147483648
    %v159 = vor.u32 1.1754944e-38, %v158
    %v160 = vsel %vm157, %v159, %v155
    %v161 = vmul.f32 1.0, %v160
    %v162 = vrcp.pop %v146
    %v163 = vmul.f32 %v146, %v162
    %v164 = vsub.f32 1.0, %v163
    %v165 = vmul.f32 %v162, %v164
    %v166 = vadd.f32 %v162, %v165
    %vm167 = vweird.f32 %v146
    %vm168 = vweird.f32 %v162
    %vm169 = vmor %vm167, %vm168
    %v170 = vsel %vm169, %v162, %v166
    %v171 = vand.u32 2147483647, %v146
    %vm172 = vcmp.eq.f32.partialorder %v171, 8.507059e+37
    %v173 = vand.u32 %v146, 2147483648
    %v174 = vor.u32 1.1754944e-38, %v173
    %v175 = vsel %vm172, %v174, %v170
    %v176 = vmul.f32 1.0, %v175
    %v177 = vmul.f32 %v103, %v161
    %v178 = vmul.f32 %v106, %v176
    %v179 = vpack.c.bf16 %v177, %v177
    %v180 = vpack.c.bf16 %v178, %v178
    %vm181 = vcmask 257024
    %182 = vst.msk [vmem:[#allocation8] sm:$0xf] %vm181, %v179
    %183 = vst.msk [vmem:[#allocation8 + $0x4] sm:$0xf] %vm181, %v180
    // Predicated region
    $region34: #{tpu_custom_call.1} parent=1 // pred_check
      _
    $region35: #{tpu_custom_call.1} parent=1 // pred_check_branch
      %185 = sbr.rel (0) target = $region37
    $region36: #{tpu_custom_call.1} parent=1 // pred_region
      %187 = vsyncadd [#allocation4], 0
      %s188 = sshll.u32 [#allocation8], 4
      %s189 = int_to_ptr.vmem [resolvable:$true] %s188
      %s190 = sshll.u32 %s5, 4
      %s191 = int_to_ptr.hbm [resolvable:$true] %s190
      %196 = dma.vmem_to_hbm [thread:$0]  %s189, 128, %s191, [#allocation4], 64, 64, 4
    $region37: #{tpu_custom_call.1} parent=1 // pred_fallthru
      _
    // Predicated region
    $region38: #{tpu_custom_call.1} parent=1 // pred_check
      _
    $region39: #{tpu_custom_call.1} parent=1 // pred_check_branch
      %198 = sbr.rel (0) target = $region41
    $region40: #{tpu_custom_call.1} parent=1 // pred_region
      %200 = dma.done [#allocation4], 128
    $region41: #{tpu_custom_call.1} parent=1 // pred_fallthru
      _
    %201 = vsyncpa [#allocation3], 1
    %202 = vsyncpa [#allocation6], 1
    %203 = vsyncpa [#allocation4], 1

</llo_original>
